<compile_context>
chip_gen: v6e
topology: v6e:2x2x1
jax: 0.10.0
libtpu: 0.0.40
codegen_flags: <defaults>
</compile_context>

<pallas_src>
import functools

import numpy as np
import jax
import jax.numpy as jnp
from jax import lax
from jax.experimental import pallas as pl
from jax.experimental.pallas import tpu as pltpu


# -----------------------------------------------------------------------------
# VMEM budget / tile selection (generation aware)
# -----------------------------------------------------------------------------
@functools.lru_cache(maxsize=1)
def _vmem_limit_bytes():
    cap = 128 << 20
    try:
        info = pltpu.get_tpu_info()
        cap = int(getattr(info, "vmem_capacity_bytes", cap))
    except Exception:  # interpret mode / very old runtimes
        pass
    # Leave headroom for Mosaic-internal scratch: ~96 MiB on v5e/v6e, ~48 MiB on v7x.
    return int(min(cap * 3 // 4, 96 << 20))


def _attn_tile_cap(vmem_limit):
    """Largest tile edge so the f32 (cap, cap) temporaries use < half the budget."""
    cap = 1024
    while cap > 128 and 32 * cap * cap > vmem_limit // 2:
        cap //= 2
    return cap


def _pick_tile(n, cap):
    """Largest lane-dense (multiple-of-128) tile <= cap that divides n."""
    best, t = 0, 128
    while t <= cap:
        if n % t == 0:
            best = t
        t += 128
    if best:
        return best
    if n > 2048:
        raise ValueError(
            f"N={n} has no lane-aligned (multiple-of-128) tile divisor <= {cap}; "
            "pad H*W to a multiple of 128.")
    return n  # tiny maps (N < 128): masked partial stores, fine for tests


def _grid_params(semantics):
    return pltpu.CompilerParams(dimension_semantics=semantics,
                                vmem_limit_bytes=_vmem_limit_bytes())


# -----------------------------------------------------------------------------
# Kernel 0: 1x1 query projection, q = Wq @ x + bq, computed once per image.
# -----------------------------------------------------------------------------
def project_query(x_flat, wq, bq):
    B, C, N = x_flat.shape
    Cq = wq.shape[0]
    Tn = _pick_tile(N, 2048)

    def kernel(x_ref, wq_ref, bq_ref, q_ref):
        q_ref[0] = jnp.dot(wq_ref[...], x_ref[0],
                           preferred_element_type=jnp.float32) + bq_ref[...]

    return pl.pallas_call(
        kernel,
        out_shape=jax.ShapeDtypeStruct((B, Cq, N), jnp.float32),
        grid=(B, N // Tn),
        in_specs=[pl.BlockSpec((1, C, Tn), lambda b, t: (b, 0, t)),
                  pl.BlockSpec((Cq, C), lambda b, t: (0, 0)),
                  pl.BlockSpec((Cq, 1), lambda b, t: (0, 0))],
        out_specs=pl.BlockSpec((1, Cq, Tn), lambda b, t: (b, 0, t)),
        compiler_params=_grid_params(("parallel", "parallel")),
    )(x_flat, wq, bq)


# -----------------------------------------------------------------------------
# Kernel 1a: attention + context flow (full path), flash-style online softmax.
# Output is the concatenated (B, 2C, N) map fed to the resblock.
# -----------------------------------------------------------------------------
def lsta_attention(x_flat, pre_flat, mask_flat, q_flat, scal, tile_cap=None):
    B, C, N = x_flat.shape
    Cq = q_flat.shape[1]
    vlim = _vmem_limit_bytes()
    cap = tile_cap if tile_cap is not None else _attn_tile_cap(vlim)
    Tq = _pick_tile(N, cap)
    Tk = _pick_tile(N, cap)
    nq, nk = N // Tq, N // Tk
    xv = x_flat.astype(jnp.bfloat16)   # bf16 value streams for the MXU
    pv = pre_flat.astype(jnp.bfloat16)

    def kernel(scal_ref, qk_ref, qq_ref, xk_ref, pk_ref, xq_ref, pq_ref, mq_ref,
               y_ref, m_sc, l_sc, ax_sc, ap_sc):
        ki = pl.program_id(2)

        @pl.when(ki == 0)
        def _init():
            m_sc[...] = jnp.full_like(m_sc, -jnp.inf)
            l_sc[...] = jnp.zeros_like(l_sc)
            ax_sc[...] = jnp.zeros_like(ax_sc)
            ap_sc[...] = jnp.zeros_like(ap_sc)

        # energy^T tile: e[j, i] = <q_key_j, q_query_i>; softmax over keys
        # (axis 0, online across key tiles) so no (N, N) tensor ever exists.
        e = lax.dot_general(qk_ref[0], qq_ref[0], (((0,), (0,)), ((), ())),
                            preferred_element_type=jnp.float32)          # (Tk, Tq)
        m_prev = m_sc[...]
        m_new = jnp.maximum(m_prev, jnp.max(e, axis=0, keepdims=True))   # (1, Tq)
        corr = jnp.exp(m_prev - m_new)
        p = jnp.exp(e - m_new)                                           # (Tk, Tq)
        l_sc[...] = corr * l_sc[...] + jnp.sum(p, axis=0, keepdims=True)
        p16 = p.astype(jnp.bfloat16)
        ax_sc[...] = corr * ax_sc[...] + jnp.dot(
            xk_ref[0], p16, preferred_element_type=jnp.float32)
        ap_sc[...] = corr * ap_sc[...] + jnp.dot(
            pk_ref[0], p16, preferred_element_type=jnp.float32)
        m_sc[...] = m_new

        @pl.when(ki == nk - 1)
        def _finalize():
            gamma = scal_ref[0]
            alpha = scal_ref[1]
            inv_l = pl.reciprocal(l_sc[...], approx=True)                # (1, Tq)
            mt = mq_ref[0]
            y_ref[0, :C, :] = gamma * (ax_sc[...] * inv_l) + xq_ref[0]
            y_ref[0, C:, :] = (alpha * mt * (ap_sc[...] * inv_l)
                               + (1.0 - mt) * pq_ref[0])

    return pl.pallas_call(
        kernel,
        out_shape=jax.ShapeDtypeStruct((B, 2 * C, N), jnp.float32),
        grid=(B, nq, nk),
        in_specs=[
            pl.BlockSpec(memory_space=pltpu.MemorySpace.SMEM),           # [gamma, alpha]
            pl.BlockSpec((1, Cq, Tk), lambda b, qi, ki: (b, 0, ki)),     # q, key tile
            pl.BlockSpec((1, Cq, Tq), lambda b, qi, ki: (b, 0, qi)),     # q, query tile
            pl.BlockSpec((1, C, Tk), lambda b, qi, ki: (b, 0, ki)),      # x values (bf16)
            pl.BlockSpec((1, C, Tk), lambda b, qi, ki: (b, 0, ki)),      # pre values (bf16)
            pl.BlockSpec((1, C, Tq), lambda b, qi, ki: (b, 0, qi)),      # x residual tile
            pl.BlockSpec((1, C, Tq), lambda b, qi, ki: (b, 0, qi)),      # pre tile
            pl.BlockSpec((1, 1, Tq), lambda b, qi, ki: (b, 0, qi)),      # mask tile
        ],
        out_specs=pl.BlockSpec((1, 2 * C, Tq), lambda b, qi, ki: (b, 0, qi)),
        scratch_shapes=[pltpu.VMEM((1, Tq), jnp.float32),
                        pltpu.VMEM((1, Tq), jnp.float32),
                        pltpu.VMEM((C, Tq), jnp.float32),
                        pltpu.VMEM((C, Tq), jnp.float32)],
        compiler_params=_grid_params(("parallel", "parallel", "arbitrary")),
    )(scal, q_flat, q_flat, xv, pv, x_flat, pre_flat, mask_flat)


# -----------------------------------------------------------------------------
# Kernel 1b: attention only (pre=None path) — no ctx accumulator / cf output.
# -----------------------------------------------------------------------------
def lsta_attention_nopre(x_flat, q_flat, scal, tile_cap=None):
    B, C, N = x_flat.shape
    Cq = q_flat.shape[1]
    vlim = _vmem_limit_bytes()
    cap = tile_cap if tile_cap is not None else _attn_tile_cap(vlim)
    Tq = _pick_tile(N, cap)
    Tk = _pick_tile(N, cap)
    nq, nk = N // Tq, N // Tk
    xv = x_flat.astype(jnp.bfloat16)

    def kernel(scal_ref, qk_ref, qq_ref, xk_ref, xq_ref, o_ref, m_sc, l_sc, ax_sc):
        ki = pl.program_id(2)

        @pl.when(ki == 0)
        def _init():
            m_sc[...] = jnp.full_like(m_sc, -jnp.inf)
            l_sc[...] = jnp.zeros_like(l_sc)
            ax_sc[...] = jnp.zeros_like(ax_sc)

        e = lax.dot_general(qk_ref[0], qq_ref[0], (((0,), (0,)), ((), ())),
                            preferred_element_type=jnp.float32)
        m_prev = m_sc[...]
        m_new = jnp.maximum(m_prev, jnp.max(e, axis=0, keepdims=True))
        corr = jnp.exp(m_prev - m_new)
        p = jnp.exp(e - m_new)
        l_sc[...] = corr * l_sc[...] + jnp.sum(p, axis=0, keepdims=True)
        ax_sc[...] = corr * ax_sc[...] + jnp.dot(
            xk_ref[0], p.astype(jnp.bfloat16), preferred_element_type=jnp.float32)
        m_sc[...] = m_new

        @pl.when(ki == nk - 1)
        def _finalize():
            gamma = scal_ref[0]
            inv_l = pl.reciprocal(l_sc[...], approx=True)
            o_ref[0] = gamma * (ax_sc[...] * inv_l) + xq_ref[0]

    return pl.pallas_call(
        kernel,
        out_shape=jax.ShapeDtypeStruct((B, C, N), jnp.float32),
        grid=(B, nq, nk),
        in_specs=[
            pl.BlockSpec(memory_space=pltpu.MemorySpace.SMEM),
            pl.BlockSpec((1, Cq, Tk), lambda b, qi, ki: (b, 0, ki)),
            pl.BlockSpec((1, Cq, Tq), lambda b, qi, ki: (b, 0, qi)),
            pl.BlockSpec((1, C, Tk), lambda b, qi, ki: (b, 0, ki)),
            pl.BlockSpec((1, C, Tq), lambda b, qi, ki: (b, 0, qi)),
        ],
        out_specs=pl.BlockSpec((1, C, Tq), lambda b, qi, ki: (b, 0, qi)),
        scratch_shapes=[pltpu.VMEM((1, Tq), jnp.float32),
                        pltpu.VMEM((1, Tq), jnp.float32),
                        pltpu.VMEM((C, Tq), jnp.float32)],
        compiler_params=_grid_params(("parallel", "parallel", "arbitrary")),
    )(scal, q_flat, q_flat, xv, x_flat)


# -----------------------------------------------------------------------------
# Fused InstanceNorm -> LeakyReLU -> 3x3 conv (im2col in VMEM, one MXU matmul).
# -----------------------------------------------------------------------------
def _in_lrelu(x):
    """InstanceNorm2d(affine=False, eps=1e-5) + LeakyReLU(0.01); single-pass stats."""
    mean = jnp.mean(x, axis=-1, keepdims=True)
    m2 = jnp.mean(x * x, axis=-1, keepdims=True)
    var = jnp.maximum(m2 - mean * mean, 0.0)
    xn = (x - mean) * lax.rsqrt(var + 1e-5)
    return jnp.where(xn >= 0.0, xn, 0.01 * xn)


# tap order matches PyTorch (kh, kw) with t = kh*3 + kw, (dh, dw) = (kh-1, kw-1)
_TAPS = tuple((dh, dw) for dh in (-1, 0, 1) for dw in (-1, 0, 1))


def _conv3x3_im2col(xn, xpad_ref, col_ref, w2d, W, N, pad_l):
    """3x3 / pad-1 conv on a flat (Cin, N=H*W) map: 9 shifted taps of a
    zero-padded buffer are written to a (9*Cin, N) im2col scratch, then one
    (Cout, 9*Cin) x (9*Cin, N) bf16 MXU matmul (f32 accumulation)."""
    Cin = xn.shape[0]
    colmod = lax.broadcasted_iota(jnp.int32, (1, N), 1) % W
    mask_l = colmod > 0          # output column 0 has no left neighbour
    mask_r = colmod < W - 1      # output column W-1 has no right neighbour
    # Zero only the pad borders; the interior is fully overwritten each step.
    xpad_ref[:, :pad_l] = jnp.zeros((Cin, pad_l), jnp.float32)
    xpad_ref[:, pad_l + N:] = jnp.zeros((Cin, W + 1), jnp.float32)
    xpad_ref[:, pad_l:pad_l + N] = xn            # lane-aligned main store
    for t, (dh, dw) in enumerate(_TAPS):
        s = pad_l + dh * W + dw
        xs = xpad_ref[:, s:s + N]                # shifted view; row pad gives zeros
        if dw == -1:                             # mask column wrap-around
            xs = jnp.where(mask_l, xs, 0.0)
        elif dw == 1:
            xs = jnp.where(mask_r, xs, 0.0)
        col_ref[t * Cin:(t + 1) * Cin, :] = xs
    return jnp.dot(w2d, col_ref[...].astype(jnp.bfloat16),
                   preferred_element_type=jnp.float32)


def in_lrelu_conv3x3(x_flat, w2d, b, W):
    B, Cin, N = x_flat.shape
    Cout = w2d.shape[0]
    pad_l = -(-(W + 1) // 128) * 128

    def kernel(x_ref, w_ref, b_ref, o_ref, xpad_ref, col_ref):
        xn = _in_lrelu(x_ref[0])
        acc = _conv3x3_im2col(xn, xpad_ref, col_ref, w_ref[...], W, N, pad_l)
        o_ref[0] = acc + b_ref[...]

    # TODO(synk): for large maps / small batch, spatially tile this kernel
    # (grid=(B, H//Th) with a 1-row halo and precomputed IN stats) so v7x's
    # second TensorCore gets work and the full map never has to sit in VMEM.
    return pl.pallas_call(
        kernel,
        out_shape=jax.ShapeDtypeStruct((B, Cout, N), jnp.float32),
        grid=(B,),
        in_specs=[pl.BlockSpec((1, Cin, N), lambda b: (b, 0, 0)),
                  pl.BlockSpec((Cout, 9 * Cin), lambda b: (0, 0)),
                  pl.BlockSpec((Cout, 1), lambda b: (0, 0))],
        out_specs=pl.BlockSpec((1, Cout, N), lambda b: (b, 0, 0)),
        scratch_shapes=[pltpu.VMEM((Cin, pad_l + N + W + 1), jnp.float32),
                        pltpu.VMEM((9 * Cin, N), jnp.float32)],
        compiler_params=_grid_params(("parallel",)),
    )(x_flat, w2d, b.reshape(Cout, 1))


def in_lrelu_conv3x3_shortcut(h_flat, y_flat, w2d, b, wb, bb, W):
    B, Cin, N = h_flat.shape
    Cout = w2d.shape[0]
    C2 = y_flat.shape[1]
    pad_l = -(-(W + 1) // 128) * 128

    def kernel(h_ref, y_ref, w_ref, b_ref, wb_ref, bb_ref, o_ref, xpad_ref, col_ref):
        xn = _in_lrelu(h_ref[0])
        acc = _conv3x3_im2col(xn, xpad_ref, col_ref, w_ref[...], W, N, pad_l)
        sc = jnp.dot(wb_ref[...], y_ref[0].astype(jnp.bfloat16),
                     preferred_element_type=jnp.float32)
        o_ref[0] = acc + b_ref[...] + sc + bb_ref[...]

    return pl.pallas_call(
        kernel,
        out_shape=jax.ShapeDtypeStruct((B, Cout, N), jnp.float32),
        grid=(B,),
        in_specs=[pl.BlockSpec((1, Cin, N), lambda b: (b, 0, 0)),
                  pl.BlockSpec((1, C2, N), lambda b: (b, 0, 0)),
                  pl.BlockSpec((Cout, 9 * Cin), lambda b: (0, 0)),
                  pl.BlockSpec((Cout, 1), lambda b: (0, 0)),
                  pl.BlockSpec((Cout, C2), lambda b: (0, 0)),
                  pl.BlockSpec((Cout, 1), lambda b: (0, 0))],
        out_specs=pl.BlockSpec((1, Cout, N), lambda b: (b, 0, 0)),
        scratch_shapes=[pltpu.VMEM((Cin, pad_l + N + W + 1), jnp.float32),
                        pltpu.VMEM((9 * Cin, N), jnp.float32)],
        compiler_params=_grid_params(("parallel",)),
    )(h_flat, y_flat, w2d, b.reshape(Cout, 1), wb, bb.reshape(Cout, 1))


# -----------------------------------------------------------------------------
# Module glue
# -----------------------------------------------------------------------------
def _im2col_weight(w):
    """(Cout, Cin, 3, 3) -> (Cout, 9*Cin), columns ordered [tap-major, cin]."""
    Cout, Cin = w.shape[0], w.shape[1]
    return (jnp.transpose(w, (2, 3, 0, 1)).reshape(9, Cout, Cin)
            .transpose(1, 0, 2).reshape(Cout, 9 * Cin))


def _lsta_resblock(params, y_flat, W):
    # LSTAResBlock(2C -> C), sample_type='none':
    #   model    = IN(2C) -> LReLU -> conv3x3 -> IN(C) -> LReLU -> conv3x3
    #   shortcut = conv1x1
    Cout = params['w1_sn'].shape[0]
    w1 = _im2col_weight(params['w1_sn']).astype(jnp.bfloat16)
    w2 = _im2col_weight(params['w2_sn']).astype(jnp.bfloat16)
    wb = params['wb_sn'].reshape(Cout, -1).astype(jnp.bfloat16)
    h = in_lrelu_conv3x3(y_flat, w1, params['b1'], W)
    return in_lrelu_conv3x3_shortcut(h, y_flat, w2, params['b2'],
                                     wb, params['bb'], W)


def lsta_forward(params, x, pre=None, mask=None, tile_cap=None):
    B, C, H, W = x.shape
    N = H * W
    xf = x.reshape(B, C, N).astype(jnp.float32)
    wq = params['wq'].reshape(C // 4, C)
    bq = params['bq'].reshape(C // 4, 1)
    scal = jnp.concatenate([params['gamma'], params['alpha']]).astype(jnp.float32)

    q = project_query(xf, wq, bq)                              # (B, Cq, N)

    if pre is None:
        out_flat = lsta_attention_nopre(xf, q, scal, tile_cap)
        return out_flat.reshape(B, C, H, W)

    pref = pre.reshape(B, C, N).astype(jnp.float32)
    mf = mask.reshape(B, 1, N).astype(jnp.float32)
    y_flat = lsta_attention(xf, pref, mf, q, scal, tile_cap)   # (B, 2C, N) = cat([out, cf])
    out_flat = _lsta_resblock(params, y_flat, W)
    return out_flat.reshape(B, C, H, W)


# -----------------------------------------------------------------------------
# Deterministic synthetic parameters.
# -----------------------------------------------------------------------------
def init_params(key, input_nc):
    C = input_nc
    ks = jax.random.split(key, 8)
    rnd = lambda k, shp: 0.1 * jax.random.normal(k, shp, jnp.float32)
    params = {
        'wq': rnd(ks[0], (C // 4, C, 1, 1)),
        'bq': rnd(ks[1], (C // 4,)),
        # PyTorch initializes gamma/alpha to zero; nonzero here so the attention
        # and context-flow paths actually contribute in this synthetic test.
        'gamma': jnp.array([0.5], jnp.float32),
        'alpha': jnp.array([0.3], jnp.float32),
        'w1': rnd(ks[2], (C, 2 * C, 3, 3)), 'b1': rnd(ks[3], (C,)),
        'w2': rnd(ks[4], (C, C, 3, 3)),     'b2': rnd(ks[5], (C,)),
        'wb': rnd(ks[6], (C, 2 * C, 1, 1)), 'bb': rnd(ks[7], (C,)),
    }
    # spectral_norm(use_spect=True): weight / sigma_max(weight.reshape(Cout, -1)).
    # TODO(synk): PyTorch estimates sigma with one power-iteration step per
    # forward; here we pre-normalize with the exact SVD value at setup.
    for name in ('w1', 'w2', 'wb'):
        w = np.asarray(params[name])
        sigma = np.linalg.svd(w.reshape(w.shape[0], -1), compute_uv=False)[0]
        params[name + '_sn'] = jnp.asarray(w / sigma)
    return params


# -----------------------------------------------------------------------------
# Pure-JAX references (numerical sanity checks of the Pallas path).
# -----------------------------------------------------------------------------
def _lsta_reference(params, x, pre, mask):
    P = jax.lax.Precision.HIGHEST
    B, C, H, W = x.shape
    N = H * W
    xf = x.reshape(B, C, N)
    wq = params['wq'].reshape(C // 4, C)
    q = jnp.einsum('oc,bcn->bon', wq, xf, precision=P) + params['bq'].reshape(1, -1, 1)
    energy = jnp.einsum('bci,bcj->bij', q, q, precision=P)
    att = jax.nn.softmax(energy, axis=-1)
    out = jnp.einsum('bcj,bij->bci', xf, att, precision=P)
    out = params['gamma'][0] * out + xf
    pref = pre.reshape(B, C, N)
    ctx = jnp.einsum('bcj,bij->bci', pref, att, precision=P)
    mf = mask.reshape(B, 1, N)
    cf = params['alpha'][0] * mf * ctx + (1.0 - mf) * pref
    y = jnp.concatenate([out, cf], axis=1).reshape(B, 2 * C, H, W)

    def inorm(z):
        mu = z.mean(axis=(2, 3), keepdims=True)
        var = ((z - mu) ** 2).mean(axis=(2, 3), keepdims=True)
        return (z - mu) / jnp.sqrt(var + 1e-5)

    def lrelu(z):
        return jnp.where(z >= 0, z, 0.01 * z)

    def conv(z, w, b, pad):
        o = lax.conv_general_dilated(z, w, (1, 1), [(pad, pad), (pad, pad)],
                                     dimension_numbers=('NCHW', 'OIHW', 'NCHW'),
                                     precision=P)
        return o + b.reshape(1, -1, 1, 1)

    h = conv(lrelu(inorm(y)), params['w1_sn'], params['b1'], 1)
    h = conv(lrelu(inorm(h)), params['w2_sn'], params['b2'], 1)
    sc = conv(y, params['wb_sn'], params['bb'], 0)
    return h + sc


def _lsta_reference_nopre(params, x):
    P = jax.lax.Precision.HIGHEST
    B, C, H, W = x.shape
    N = H * W
    xf = x.reshape(B, C, N)
    wq = params['wq'].reshape(C // 4, C)
    q = jnp.einsum('oc,bcn->bon', wq, xf, precision=P) + params['bq'].reshape(1, -1, 1)
    energy = jnp.einsum('bci,bcj->bij', q, q, precision=P)
    att = jax.nn.softmax(energy, axis=-1)
    out = jnp.einsum('bcj,bij->bci', xf, att, precision=P)
    return (params['gamma'][0] * out + xf).reshape(B, C, H, W)


if __name__ == "__main__":
    key = jax.random.PRNGKey(0)
    B, C, H, W = 2, 8, 16, 16
    k1, k2, k3, k4 = jax.random.split(key, 4)
    params = init_params(k1, C)
    x = jax.random.normal(k2, (B, C, H, W), jnp.float32)
    pre = jax.random.normal(k3, (B, C, H, W), jnp.float32)
    mask = (jax.random.uniform(k4, (B, 1, H, W)) > 0.5).astype(jnp.float32)

    ref_nopre = _lsta_reference_nopre(params, x)
    ref_full = _lsta_reference(params, x, pre, mask)

    # pre=None path (attention only)
    out_nopre = jax.block_until_ready(lsta_forward(params, x))
    # full path (attention + context flow + LSTAResBlock), auto tile size
    out_full = jax.block_until_ready(lsta_forward(params, x, pre, mask))
    # force small tiles so the multi-tile online-softmax path is exercised
    out_nopre_t = jax.block_until_ready(lsta_forward(params, x, tile_cap=128))
    out_full_t = jax.block_until_ready(lsta_forward(params, x, pre, mask, tile_cap=128))

    errs = [
        float(jnp.max(jnp.abs(out_nopre - ref_nopre))),
        float(jnp.max(jnp.abs(out_full - ref_full))),
        float(jnp.max(jnp.abs(out_nopre_t - ref_nopre))),
        float(jnp.max(jnp.abs(out_full_t - ref_full))),
    ]
    shapes_ok = (out_nopre.shape == (B, C, H, W) and out_full.shape == (B, C, H, W))
    if not (shapes_ok and all(e < 5e-2 for e in errs)):
        raise AssertionError(f"mismatch: shapes_ok={shapes_ok} errs={errs}")
    print("KERNEL_OK")
</pallas_src>

<mosaic_0001>
module attributes {stable_mosaic.version = 11 : i64} {
  func.func @kernel(%arg0: i32, %arg1: i32, %arg2: memref<1x8x256xf32, #tpu.memory_space<vmem>>, %arg3: memref<2x8xf32, #tpu.memory_space<vmem>>, %arg4: memref<2x1xf32, #tpu.memory_space<vmem>>, %arg5: memref<1x2x256xf32, #tpu.memory_space<vmem>>) attributes {dimension_semantics = [#tpu.dimension_semantics<parallel>, #tpu.dimension_semantics<parallel>], iteration_bounds = array<i64: 2, 1>, scalar_prefetch = 0 : i64, scratch_operands = 0 : i64, tpu.core_type = #tpu.core_type<tc>, window_params = [{transform_indices = @transform_0, window_bounds = array<i64: 1, 8, 256>}, {pipeline_mode = #tpu.pipeline_mode<synchronous>, transform_indices = @transform_1, window_bounds = array<i64: 2, 8>}, {pipeline_mode = #tpu.pipeline_mode<synchronous>, transform_indices = @transform_2, window_bounds = array<i64: 2, 1>}, {transform_indices = @transform_3, window_bounds = array<i64: 1, 2, 256>}]} {
    %c0 = arith.constant 0 : index
    %c0_0 = arith.constant 0 : index
    %0 = vector.load %arg3[%c0, %c0_0] : memref<2x8xf32, #tpu.memory_space<vmem>>, vector<2x8xf32>
    %c0_1 = arith.constant 0 : index
    %c0_2 = arith.constant 0 : index
    %c0_3 = arith.constant 0 : index
    %1 = vector.load %arg2[%c0_1, %c0_2, %c0_3] : memref<1x8x256xf32, #tpu.memory_space<vmem>>, vector<1x8x256xf32>
    %2 = vector.shape_cast %1 : vector<1x8x256xf32> to vector<8x256xf32>
    %cst = arith.constant dense<0.000000e+00> : vector<2x256xf32>
    %3 = tpu.matmul %0, %2, %cst {dimension_numbers = #tpu.dot_dimension_numbers<[1], [0], [0], [1], [0, 0, 1, 1], [], []>} : vector<2x8xf32>, vector<8x256xf32>, vector<2x256xf32> -> vector<2x256xf32>
    %c0_4 = arith.constant 0 : index
    %c0_5 = arith.constant 0 : index
    %4 = vector.load %arg4[%c0_4, %c0_5] : memref<2x1xf32, #tpu.memory_space<vmem>>, vector<2x1xf32>
    %5 = vector.broadcast %4 : vector<2x1xf32> to vector<2x256xf32>
    %6 = arith.addf %3, %5 : vector<2x256xf32>
    %c0_6 = arith.constant 0 : index
    %c0_7 = arith.constant 0 : index
    %c0_8 = arith.constant 0 : index
    %7 = vector.load %arg5[%c0_6, %c0_7, %c0_8] : memref<1x2x256xf32, #tpu.memory_space<vmem>>, vector<1x2x256xf32>
    %8 = vector.shape_cast %7 : vector<1x2x256xf32> to vector<2x256xf32>
    %9 = vector.shape_cast %6 : vector<2x256xf32> to vector<1x2x256xf32>
    tpu.vector_store %arg5[%c0_6, %c0_7, %c0_8], %9 {strides = array<i32>} : memref<1x2x256xf32, #tpu.memory_space<vmem>>, vector<1x2x256xf32>,
    return
  }
  func.func @transform_0(%arg0: i32, %arg1: i32) -> (i32, i32, i32) {
    %c0_i32 = arith.constant 0 : i32
    %c0_i32_0 = arith.constant 0 : i32
    return %arg0, %c0_i32, %arg1 : i32, i32, i32
  }
  func.func @transform_1(%arg0: i32, %arg1: i32) -> (i32, i32) {
    %c0_i32 = arith.constant 0 : i32
    %c0_i32_0 = arith.constant 0 : i32
    %c0_i32_1 = arith.constant 0 : i32
    return %c0_i32, %c0_i32_0 : i32, i32
  }
  func.func @transform_2(%arg0: i32, %arg1: i32) -> (i32, i32) {
    %c0_i32 = arith.constant 0 : i32
    %c0_i32_0 = arith.constant 0 : i32
    %c0_i32_1 = arith.constant 0 : i32
    return %c0_i32, %c0_i32_0 : i32, i32
  }
  func.func @transform_3(%arg0: i32, %arg1: i32) -> (i32, i32, i32) {
    %c0_i32 = arith.constant 0 : i32
    %c0_i32_0 = arith.constant 0 : i32
    return %arg0, %c0_i32, %arg1 : i32, i32, i32
  }
}

</mosaic_0001>

<llo_original>
// kernel: tpu_custom_call.1
$region0: #{tpu_custom_call.1}
  #allocation0 [shape = 'u32[]', space=smem, size = 0x4, offset = 0x4, fixed_abs, tag = 'smem constant byte address 0x4 - core index']
  #allocation1 [shape = 'u32[144,128]{1,0:T(1,128)}', space=vmem, size = 0x12000, scoped, tag = 'internal scratch']
  %s0 = inlined_call_operand.hbm [shape: f32[2,8,256], index: 0, kind: input, shape index: {}]
  %s1 = inlined_call_operand.vmem [shape: f32[2,8], index: 1, kind: input, shape index: {}]
  %s2 = inlined_call_operand.vmem [shape: f32[2,1], index: 2, kind: input, shape index: {}]
  %s3 = inlined_call_operand.hbm [shape: f32[2,2,256], index: 3, kind: output, shape index: {}]
  %s4 = sld [smem:[#allocation0]]
  $region49: #{tpu_custom_call.1} parent=0
    _
  %s6 = ssub.s32 1, %s4
  %s7 = scalar_select 0, %s6, %s4
  $region1: #{tpu_custom_call.1} parent=0
    #allocation2 [shape = 'u8[16384]{0}', space=vmem, size = 0x4000, scoped, tag = 'input window, operand 0']
    #allocation3 [shape = 's32[2]{0}', space=sflag, size = 0x8, scoped, tag = 'scoped memory for tpu_custom_call.1']
    #allocation4 [shape = 's32[2]{0}', space=sflag, size = 0x8, scoped, tag = 'scoped memory for tpu_custom_call.1']
    #allocation5 [shape = 'u8[4096]{0}', space=vmem, size = 0x1000, scoped, tag = 'output window, operand 0']
    %8 = vsyncpa [#allocation3], 0
    %s9 = scalar_lea.sflag [#allocation3], 1
    %10 = vsyncpa %s9, 0
    %11 = vsyncpa [#allocation4], 0
    %s12 = scalar_lea.sflag [#allocation4], 1
    %13 = vsyncpa %s12, 0
    loop: start=0, step=1, limit=4
    $region2: #{tpu_custom_call.1} parent=1 // loop_pre_header
      _
    $region3: #{tpu_custom_call.1} parent=1 // loop_header
      %s15 = sphi 0, %s19
      %p16 = scmp.ge.s32.totalorder %s15, 4
      %s22 = sphi 0, %s34
      %s23 = sphi 0, %s30
      %s24 = sphi 0, %s22
      %s25 = sphi 0, %s23
      %s26 = sphi 0, %s24
      %s27 = sphi 0, %s25
      %s39 = sphi 0, %s41
      %s42 = sphi 0, %s39
      %s43 = sphi 0, %s42
      %s59 = sphi 0, %s43
      %s63 = sphi 0, %s63
      %s65 = sphi 0, %s63
      %s66 = sphi 0, %s65
      %s80 = sphi 0, %s66
      %s84 = sphi 0, %s84
      %s86 = sphi 0, %s84
      %s87 = sphi 0, %s86
      %s101 = sphi 0, %s87
      %s109 = sphi 0, %s111
      %s112 = sphi 0, %s109
      %s113 = sphi 0, %s112
      %s129 = sphi 0, %s113
    $region4: #{tpu_custom_call.1} parent=1 // loop_header_branch
      %18 = sbr.rel (%p16) target = $region8
    $region5: #{tpu_custom_call.1} parent=1 // loop_body
      %s20 = ssub.s32 %s15, 1
      %s21 = ssub.s32 %s15, 2
      %s28 = sadd.s32 1, %s23
      %p29 = scmp.ge.s32.totalorder %s28, 1
      %s30 = scalar_select %p29, 0, %s28
      %s31 = sadd.s32 1, %s22
      %s32 = scalar_select %p29, %s31, %s22
      %p33 = scmp.ge.s32.totalorder %s32, 2
      %s34 = scalar_select %p33, 0, %s32
      %s35 = ssub.s32 %s22, %s34
      %s36 = ssub.s32 %s23, %s30
      %s37 = sor.u32 %s35, %s36
      %p38 = scmp.eq.s32.totalorder %s37, 0
      %s40 = sadd.s32 %s39, 1
      %s41 = scalar_select %p38, %s39, %s40
      %p44 = pneg %p38
      %p45 = scmp.eq.s32.totalorder %s15, 1
      %p46 = por %p44, %p45
      %p47 = scmp.ne.s32.totalorder %s39, %s42
      %p48 = scmp.eq.s32.totalorder %s15, 0
      %p49 = por %p47, %p48
      %p50 = scmp.ne.s32.totalorder %s39, %s42
      %p51 = scmp.eq.s32.totalorder %s20, 1
      %p52 = por %p50, %p51
      %p53 = scmp.ne.s32.totalorder %s42, %s43
      %p54 = scmp.eq.s32.totalorder %s20, 0
      %p55 = por %p53, %p54
      %p56 = scmp.ne.s32.totalorder %s42, %s43
      %p57 = scmp.eq.s32.totalorder %s21, 1
      %p58 = por %p56, %p57
      %p60 = scmp.ne.s32.totalorder %s43, %s59
      %p61 = scmp.eq.s32.totalorder %s21, 0
      %p62 = por %p60, %p61
      %s64 = sadd.s32 %s63, 1
      %p67 = scmp.eq.s32.totalorder %s15, 1
      %p68 = scmp.ne.s32.totalorder %s63, %s65
      %p69 = scmp.eq.s32.totalorder %s15, 0
      %p70 = por %p68, %p69
      %p71 = scmp.ne.s32.totalorder %s63, %s65
      %p72 = scmp.eq.s32.totalorder %s20, 1
      %p73 = por %p71, %p72
      %p74 = scmp.ne.s32.totalorder %s65, %s66
      %p75 = scmp.eq.s32.totalorder %s20, 0
      %p76 = por %p74, %p75
      %p77 = scmp.ne.s32.totalorder %s65, %s66
      %p78 = scmp.eq.s32.totalorder %s21, 1
      %p79 = por %p77, %p78
      %p81 = scmp.ne.s32.totalorder %s66, %s80
      %p82 = scmp.eq.s32.totalorder %s21, 0
      %p83 = por %p81, %p82
      %s85 = sadd.s32 %s84, 1
      %p88 = scmp.eq.s32.totalorder %s15, 1
      %p89 = scmp.ne.s32.totalorder %s84, %s86
      %p90 = scmp.eq.s32.totalorder %s15, 0
      %p91 = por %p89, %p90
      %p92 = scmp.ne.s32.totalorder %s84, %s86
      %p93 = scmp.eq.s32.totalorder %s20, 1
      %p94 = por %p92, %p93
      %p95 = scmp.ne.s32.totalorder %s86, %s87
      %p96 = scmp.eq.s32.totalorder %s20, 0
      %p97 = por %p95, %p96
      %p98 = scmp.ne.s32.totalorder %s86, %s87
      %p99 = scmp.eq.s32.totalorder %s21, 1
      %p100 = por %p98, %p99
      %p102 = scmp.ne.s32.totalorder %s87, %s101
      %p103 = scmp.eq.s32.totalorder %s21, 0
      %p104 = por %p102, %p103
      %s105 = ssub.s32 %s22, %s34
      %s106 = ssub.s32 %s23, %s30
      %s107 = sor.u32 %s105, %s106
      %p108 = scmp.eq.s32.totalorder %s107, 0
      %s110 = sadd.s32 %s109, 1
      %s111 = scalar_select %p108, %s109, %s110
      %p114 = pneg %p108
      %p115 = scmp.eq.s32.totalorder %s15, 1
      %p116 = por %p114, %p115
      %p117 = scmp.ne.s32.totalorder %s109, %s112
      %p118 = scmp.eq.s32.totalorder %s15, 0
      %p119 = por %p117, %p118
      %p120 = scmp.ne.s32.totalorder %s109, %s112
      %p121 = scmp.eq.s32.totalorder %s20, 1
      %p122 = por %p120, %p121
      %p123 = scmp.ne.s32.totalorder %s112, %s113
      %p124 = scmp.eq.s32.totalorder %s20, 0
      %p125 = por %p123, %p124
      %p126 = scmp.ne.s32.totalorder %s112, %s113
      %p127 = scmp.eq.s32.totalorder %s21, 1
      %p128 = por %p126, %p127
      %p130 = scmp.ne.s32.totalorder %s113, %s129
      %p131 = scmp.eq.s32.totalorder %s21, 0
      %p132 = por %p130, %p131
      %p133 = scmp.le.s32.totalorder 1, %s15
      %p134 = scmp.lt.s32.totalorder %s15, 3
      %p135 = pnand %p133, %p134
      %p136 = pneg %p135
      // Predicated region
      $region9: #{tpu_custom_call.1} parent=5 // pred_check
        _
      $region10: #{tpu_custom_call.1} parent=5 // pred_check_branch
        %138 = sbr.rel (%p135) target = $region12
      $region11: #{tpu_custom_call.1} parent=5 // pred_region
        %s139 = ssub.s32 %s15, 1
        // Predicated region
        $region13: #{tpu_custom_call.1} parent=11 // pred_check
          %p140 = pneg %p76
        $region14: #{tpu_custom_call.1} parent=11 // pred_check_branch
          %142 = sbr.rel (%p140) target = $region16
        $region15: #{tpu_custom_call.1} parent=11 // pred_region
          _
        $region16: #{tpu_custom_call.1} parent=11 // pred_fallthru
          _
        // Predicated region
        $region17: #{tpu_custom_call.1} parent=11 // pred_check
          %p143 = pneg %p97
        $region18: #{tpu_custom_call.1} parent=11 // pred_check_branch
          %145 = sbr.rel (%p143) target = $region20
        $region19: #{tpu_custom_call.1} parent=11 // pred_region
          _
        $region20: #{tpu_custom_call.1} parent=11 // pred_fallthru
          _
      $region12: #{tpu_custom_call.1} parent=5 // pred_fallthru
        _
      %p146 = scmp.lt.s32.totalorder %s15, 2
      // Predicated region
      $region21: #{tpu_custom_call.1} parent=5 // pred_check
        %p147 = pneg %p146
      $region22: #{tpu_custom_call.1} parent=5 // pred_check_branch
        %149 = sbr.rel (%p147) target = $region24
      $region23: #{tpu_custom_call.1} parent=5 // pred_region
        // Predicated region
        $region25: #{tpu_custom_call.1} parent=23 // pred_check
          %p150 = pneg %p49
        $region26: #{tpu_custom_call.1} parent=23 // pred_check_branch
          %152 = sbr.rel (%p150) target = $region28
        $region27: #{tpu_custom_call.1} parent=23 // pred_region
          %s153 = sand.u32 %s39, 1
          %s154 = scalar_lea.sflag [#allocation3], %s153
          %s155 = sand.u32 %s39, 1
          %s156 = smul.addr %s155, 16
          %s157 = scalar_lea.vmem [#allocation2], %s156
          %s158 = smul.u32 2, %s23
          %s160 = ssub.s32 256, 256
          %161 = vsyncadd %s154, %s160
          %s162 = smul.addr %s22, 2
          %s163 = sadd.s32 %s158, %s162
          %s164 = smul.addr %s163, 128
          %s165 = scalar_lea.hbm %s0, %s164
          %s167 = sshll.u32 %s157, 4
          %s168 = int_to_ptr.vmem [resolvable:$true] %s167
          %170 = dma.hbm_to_vmem [thread:$0]  %s165, 256, %s168, %s154
        $region28: #{tpu_custom_call.1} parent=23 // pred_fallthru
          _
      $region24: #{tpu_custom_call.1} parent=5 // pred_fallthru
        _
      %p171 = scmp.le.s32.totalorder 1, %s15
      %p172 = scmp.lt.s32.totalorder %s15, 3
      %p173 = pnand %p171, %p172
      %p174 = pneg %p173
      // Predicated region
      $region29: #{tpu_custom_call.1} parent=5 // pred_check
        _
      $region30: #{tpu_custom_call.1} parent=5 // pred_check_branch
        %176 = sbr.rel (%p173) target = $region32
      $region31: #{tpu_custom_call.1} parent=5 // pred_region
        %s177 = ssub.s32 %s15, 1
        %s178 = sand.u32 %s42, 1
        %s179 = scalar_lea.sflag [#allocation3], %s178
        %s180 = sand.u32 %s42, 1
        %s181 = smul.addr %s180, 16
        %s182 = scalar_lea.vmem [#allocation2], %s181
        // Predicated region
        $region33: #{tpu_custom_call.1} parent=31 // pred_check
          %p183 = pneg %p55
        $region34: #{tpu_custom_call.1} parent=31 // pred_check_branch
          %185 = sbr.rel (%p183) target = $region36
        $region35: #{tpu_custom_call.1} parent=31 // pred_region
          %186 = dma.done %s179, 256
        $region36: #{tpu_custom_call.1} parent=31 // pred_fallthru
          _
        %s187 = sand.u32 %s42, 1
        %s188 = scalar_lea.sflag [#allocation3], %s187
        %s189 = sand.u32 %s42, 1
        %s190 = smul.addr %s189, 16
        %s191 = scalar_lea.vmem [#allocation2], %s190
        %p192 = pneg %p55
        %p193 = pneg %p52
        %p194 = pneg %p76
        %p195 = pneg %p73
        %p196 = pneg %p97
        %p197 = pneg %p94
        %p198 = pneg %p125
        %p199 = pneg %p122
        %s200 = sand.u32 %s112, 1
        %s201 = scalar_lea.sflag [#allocation4], %s200
        %s202 = sand.u32 %s112, 1
        %s203 = smul.addr %s202, 4
        %s204 = scalar_lea.vmem [#allocation5], %s203
        %s205 = smul.u32 2, %s25
        %s206 = smul.u32 2, %s25
        %v207 = vld [vmem:[%s1] sm:$0x3]
        %v208 = vld [vmem:[%s182] sm:$0xff]
        %v209 = vld [vmem:[%s182 + $0x8] sm:$0xff]
        %v210 = vld [vmem:[%s2] sm:$0x3]
        %212 = vset.pattern.permute.xlu0 0
        %213 = vperm.xlu0 %212, %v210
        %v214 = vpop.permute.xlu0 %213
        %vm216 = vcmask 64512
        %v218 = vsel %vm216, %v207, 0
        %220 = vmatprep.subr.mxu0 0.0
        %221 = vmatpush1.msra.mxu0 0.0
        %222 = vmatprep.subr.mxu0 0.0
        %223 = vmatpush1.msra.mxu0 0.0
        %224 = vmatprep.subr.mxu0 0.0
        %225 = vmatpush1.msra.mxu0 0.0
        %226 = vmatprep.subr.mxu0 0.0
        %227 = vmatpush1.msra.mxu0 0.0
        %228 = vmatprep.subr.mxu0 0.0
        %229 = vmatpush1.msra.mxu0 0.0
        %230 = vmatprep.subr.mxu0 0.0
        %231 = vmatpush1.msra.mxu0 0.0
        %232 = vmatprep.subr.mxu0 0.0
        %233 = vmatpush1.msra.mxu0 0.0
        %234 = vmatprep.subr.mxu0 0.0
        %235 = vmatpush1.msra.mxu0 0.0
        %236 = vmatprep.subr.mxu0 0.0
        %237 = vmatpush1.msra.mxu0 0.0
        %238 = vmatprep.subr.mxu0 0.0
        %239 = vmatpush1.msra.mxu0 0.0
        %240 = vmatprep.subr.mxu0 0.0
        %241 = vmatpush1.msra.mxu0 0.0
        %242 = vmatprep.subr.mxu0 0.0
        %243 = vmatpush1.msra.mxu0 0.0
        %244 = vmatprep.subr.mxu0 0.0
        %245 = vmatpush1.msra.mxu0 0.0
        %246 = vmatprep.subr.mxu0 0.0
        %247 = vmatpush1.msra.mxu0 0.0
        %248 = vmatprep.subr.mxu0 0.0
        %249 = vmatpush1.msra.mxu0 0.0
        %250 = vmatprep.subr.mxu0 %v209
        %251 = vmatpush1.msra.mxu0 %v208
        %252 = vmatprep.subr.mxu0 0.0
        %253 = vmatpush2.msra.mxu0 0.0
        %254 = vmatprep.subr.mxu0 0.0
        %255 = vmatpush2.msra.mxu0 0.0
        %256 = vmatprep.subr.mxu0 0.0
        %257 = vmatpush2.msra.mxu0 0.0
        %258 = vmatprep.subr.mxu0 0.0
        %259 = vmatpush2.msra.mxu0 0.0
        %260 = vmatprep.subr.mxu0 0.0
        %261 = vmatpush2.msra.mxu0 0.0
        %262 = vmatprep.subr.mxu0 0.0
        %263 = vmatpush2.msra.mxu0 0.0
        %264 = vmatprep.subr.mxu0 0.0
        %265 = vmatpush2.msra.mxu0 0.0
        %266 = vmatprep.subr.mxu0 0.0
        %267 = vmatpush2.msra.mxu0 0.0
        %268 = vmatprep.subr.mxu0 0.0
        %269 = vmatpush2.msra.mxu0 0.0
        %270 = vmatprep.subr.mxu0 0.0
        %271 = vmatpush2.msra.mxu0 0.0
        %272 = vmatprep.subr.mxu0 0.0
        %273 = vmatpush2.msra.mxu0 0.0
        %274 = vmatprep.subr.mxu0 0.0
        %275 = vmatpush2.msra.mxu0 0.0
        %276 = vmatprep.subr.mxu0 0.0
        %277 = vmatpush2.msra.mxu0 0.0
        %278 = vmatprep.subr.mxu0 0.0
        %279 = vmatpush2.msra.mxu0 0.0
        %280 = vmatprep.subr.mxu0 0.0
        %281 = vmatpush2.msra.mxu0 0.0
        %282 = vmatprep.subr.mxu0 0.0
        %283 = vmatpush2.msra.mxu0 0.0
        %284 = vmatprep.mubr.f32.mxu0 0.0
        %285 = vmatmul.mubr.f32.gmra.mxu0 %v218
        %v286 = vpop.f32.mrf.mxu0
        %v287 = vadd.f32 %v214, %v286
        %v288 = vpop.f32.mrf.mxu0
        %v289 = vadd.f32 %v214, %v288
        %290 = vdwg.mxu0
        %v293 = vcombine.low %v287, %v289
        %v295 = vunpack.c.l.s4 1983009808
        %v296 = vunpack.c.0.s8 %v295
        %v297 = vlaneseq
        %v298 = vshrl.u32 %v297, 7
        %v299 = vsub.s32 %v296, %v298
        %v300 = vrot.slane %v293, %v299
        %302 = vst [vmem:[%s204] sm:$0xf] %v300
        %s303 = sand.u32 %s112, 1
        %s304 = scalar_lea.sflag [#allocation4], %s303
        %s305 = sand.u32 %s112, 1
        %s306 = smul.addr %s305, 4
        %s307 = scalar_lea.vmem [#allocation5], %s306
        // Predicated region
        $region37: #{tpu_custom_call.1} parent=31 // pred_check
          %p308 = pneg %p122
        $region38: #{tpu_custom_call.1} parent=31 // pred_check_branch
          %310 = sbr.rel (%p308) target = $region40
        $region39: #{tpu_custom_call.1} parent=31 // pred_region
          %s311 = smul.u32 2, %s25
          %s313 = ssub.s32 64, 64
          %314 = vsyncadd %s304, %s313
          %s315 = smul.addr %s24, 2
          %s316 = sadd.s32 %s311, %s315
          %s317 = smul.addr %s316, 32
          %s318 = scalar_lea.hbm %s3, %s317
          %s320 = sshll.u32 %s307, 4
          %s321 = int_to_ptr.vmem [resolvable:$true] %s320
          %323 = dma.vmem_to_hbm [thread:$0]  %s321, 64, %s318, %s304
        $region40: #{tpu_custom_call.1} parent=31 // pred_fallthru
          _
      $region32: #{tpu_custom_call.1} parent=5 // pred_fallthru
        _
      %p324 = scmp.le.s32.totalorder 2, %s15
      // Predicated region
      $region41: #{tpu_custom_call.1} parent=5 // pred_check
        %p325 = pneg %p324
      $region42: #{tpu_custom_call.1} parent=5 // pred_check_branch
        %327 = sbr.rel (%p325) target = $region44
      $region43: #{tpu_custom_call.1} parent=5 // pred_region
        %s328 = ssub.s32 %s15, 2
        // Predicated region
        $region45: #{tpu_custom_call.1} parent=43 // pred_check
          %p329 = pneg %p128
        $region46: #{tpu_custom_call.1} parent=43 // pred_check_branch
          %331 = sbr.rel (%p329) target = $region48
        $region47: #{tpu_custom_call.1} parent=43 // pred_region
          %s332 = sand.u32 %s113, 1
          %s333 = scalar_lea.sflag [#allocation4], %s332
          %s334 = sand.u32 %s113, 1
          %s335 = smul.addr %s334, 4
          %s336 = scalar_lea.vmem [#allocation5], %s335
          %337 = dma.done %s333, 64
        $region48: #{tpu_custom_call.1} parent=43 // pred_fallthru
          _
      $region44: #{tpu_custom_call.1} parent=5 // pred_fallthru
        _
    $region6: #{tpu_custom_call.1} parent=1 // loop_footer
      %s19 = sadd.s32 1, %s15
    $region7: #{tpu_custom_call.1} parent=1 // loop_footer_branch
      %14 = sbr.rel target = $region3
    $region8: #{tpu_custom_call.1} parent=1 // loop_exit
      _
    %338 = vsyncpa [#allocation3], 1
    %s339 = scalar_lea.sflag [#allocation3], 1
    %340 = vsyncpa %s339, 1
    %341 = vsyncpa [#allocation4], 1
    %s342 = scalar_lea.sflag [#allocation4], 1
    %343 = vsyncpa %s342, 1

</llo_original>
